<compile_context>
chip_gen: v7x
topology: tpu7x:2x2x1
jax: 0.10.0
libtpu: 0.0.40
codegen_flags: <defaults>
</compile_context>

<pallas_src>
import math
import jax
import jax.numpy as jnp
from jax.experimental import pallas as pl
from jax.experimental.pallas import tpu as pltpu


# ---------------------------------------------------------------- kernels ----

def _fourier_kernel_single(x_ref, w_ref, b_ref, o_ref):
    # x_ref: (tile_n, in_features)
    # w_ref: (in_features, F)   -- pre-transposed, lane-dense, MXU-native RHS
    # b_ref: (1, F)
    # o_ref: (tile_n, 2*F)      -- lane-dense 2-D output block
    F = w_ref.shape[1]
    y = jnp.dot(x_ref[...], w_ref[...], preferred_element_type=jnp.float32)
    y = y + b_ref[...].astype(jnp.float32)          # (1, F) broadcast over rows
    o_ref[:, :F] = jnp.sin(y).astype(o_ref.dtype)
    o_ref[:, F:] = jnp.cos(y).astype(o_ref.dtype)


def _fourier_kernel_split(x_ref, w_ref, b_ref, sin_ref, cos_ref):
    # Feature-tiled path: two separate lane-dense (tile_n, tile_f) outputs.
    y = jnp.dot(x_ref[...], w_ref[...], preferred_element_type=jnp.float32)
    y = y + b_ref[...].astype(jnp.float32)
    sin_ref[...] = jnp.sin(y).astype(sin_ref.dtype)
    cos_ref[...] = jnp.cos(y).astype(cos_ref.dtype)


# ------------------------------------------------------------- tile logic ----

def _vmem_plan():
    """Generation-aware VMEM limit and per-block byte budget."""
    try:
        cap = int(pltpu.get_tpu_info().vmem_capacity_bytes)
    except Exception:
        cap = 64 * 1024 * 1024  # conservative (v7x-class) fallback
    # v7x (64 MiB VMEM) -> ~48 MiB scoped limit; v5e/v6e (128 MiB) -> 96 MiB.
    vmem_limit = min(96 * 1024 * 1024, max(32 * 1024 * 1024, (cap * 3) // 4))
    block_budget = max(4 * 1024 * 1024, vmem_limit // 6)
    return vmem_limit, block_budget


def _pick_tiles(N, in_features, out_features, x_itemsize, out_itemsize,
                block_budget, tile_n, tile_f):
    # Feature tiling only for large out_features; tile_f stays lane-dense
    # (multiple of 128) so both sin/cos stores are unmasked vst.
    if tile_f is None:
        if out_features > 2048 and out_features % 256 == 0:
            tile_f = 256
        else:
            tile_f = out_features
    if tile_f != out_features and (out_features % tile_f != 0 or tile_f % 128 != 0):
        tile_f = out_features

    # Sublane alignment for the row axis (8 for 32-bit, 16 for 16-bit packing).
    min_item = min(x_itemsize, out_itemsize)
    align = 8 if min_item >= 4 else 16

    if tile_n is None:
        # Double-buffered x block + double-buffered output block(s), per row.
        per_row = 2 * (in_features * x_itemsize + 2 * tile_f * out_itemsize)
        tile_n = block_budget // max(per_row, 1)
        tile_n = max(align, min(2048, int(tile_n)))

    if tile_n >= N:
        # Keep >= 2 row blocks when N is large enough: both v7x TensorCores get
        # work and the pipeline actually overlaps DMA with compute.
        if N > align:
            half = -(-N // 2)                      # cdiv(N, 2)
            half = -(-half // align) * align       # round up to alignment
            tile_n = min(N, half)
        else:
            tile_n = N
    else:
        tile_n = max(align, (tile_n // align) * align)
    return tile_n, tile_f


# ----------------------------------------------------------------- wrapper ---

def fourier_embedding(x, weight, bias=None, *, tile_n=None, tile_f=None,
                      out_dtype=None):
    """x: (N, in_features); weight: (out_features, in_features); bias: (out_features,)."""
    N, in_features = x.shape
    out_features, k = weight.shape
    assert k == in_features
    if out_dtype is None:
        out_dtype = x.dtype
    if bias is None:
        bias = jnp.zeros((out_features,), dtype=weight.dtype)

    x_itemsize = jnp.dtype(x.dtype).itemsize
    out_itemsize = jnp.dtype(out_dtype).itemsize
    vmem_limit, block_budget = _vmem_plan()
    tile_n, tile_f = _pick_tiles(N, in_features, out_features,
                                 x_itemsize, out_itemsize,
                                 block_budget, tile_n, tile_f)

    # One-time tiny transforms in the wrapper (free relative to the kernel).
    w_t = weight.T                      # (in_features, out_features) - MXU-native
    b2 = bias.reshape(1, out_features)  # 2-D for TPU-friendly broadcast

    grid = (pl.cdiv(N, tile_n), out_features // tile_f)

    cost = pl.CostEstimate(
        flops=2 * N * in_features * out_features,
        transcendentals=2 * N * out_features,
        bytes_accessed=(x.size * x_itemsize
                        + weight.size * jnp.dtype(weight.dtype).itemsize
                        + bias.size * jnp.dtype(bias.dtype).itemsize
                        + N * 2 * out_features * out_itemsize),
    )
    cparams = pltpu.CompilerParams(
        dimension_semantics=("parallel", "parallel"),
        vmem_limit_bytes=vmem_limit,
    )

    in_specs = [
        pl.BlockSpec((tile_n, in_features), lambda i, j: (i, 0)),
        pl.BlockSpec((in_features, tile_f), lambda i, j: (0, j)),
        pl.BlockSpec((1, tile_f), lambda i, j: (0, j)),
    ]

    if tile_f == out_features:
        # Single lane-dense (N, 2*F) output; no wrapper-side reshape/relayout.
        out = pl.pallas_call(
            _fourier_kernel_single,
            out_shape=jax.ShapeDtypeStruct((N, 2 * out_features), out_dtype),
            grid=grid,
            in_specs=in_specs,
            out_specs=pl.BlockSpec((tile_n, 2 * out_features), lambda i, j: (i, 0)),
            compiler_params=cparams,
            cost_estimate=cost,
        )(x, w_t, b2)
        return out

    # Feature-tiled path: two lane-dense outputs, concatenated once.
    sin_out, cos_out = pl.pallas_call(
        _fourier_kernel_split,
        out_shape=(jax.ShapeDtypeStruct((N, out_features), out_dtype),
                   jax.ShapeDtypeStruct((N, out_features), out_dtype)),
        grid=grid,
        in_specs=in_specs,
        out_specs=(pl.BlockSpec((tile_n, tile_f), lambda i, j: (i, j)),
                   pl.BlockSpec((tile_n, tile_f), lambda i, j: (i, j))),
        compiler_params=cparams,
        cost_estimate=cost,
    )(x, w_t, b2)
    return jnp.concatenate([sin_out, cos_out], axis=-1)


# ------------------------------------------------------------------ params ---

def make_params(key, in_features, out_features, std_dev=3.0, dtype=jnp.float32):
    """Deterministic re-implementation of Fourier_Embedding.glorot_init."""
    kw, kb = jax.random.split(key)
    weight = std_dev * jax.random.normal(kw, (out_features, in_features), dtype=dtype)
    fan_in = in_features
    bound = 1.0 / math.sqrt(fan_in) if fan_in > 0 else 0.0
    bias = jax.random.uniform(kb, (out_features,), dtype=dtype,
                              minval=-bound, maxval=bound)
    return weight, bias


def _reference(x, weight, bias):
    y = x @ weight.T + bias
    return jnp.concatenate([jnp.sin(y), jnp.cos(y)], axis=-1)


if __name__ == "__main__":
    key = jax.random.PRNGKey(0)
    k_x, k_p, k_x2, k_p3, k_x3 = jax.random.split(key, 5)

    # 1) Small shapes consistent with the module's forward: a batch of points
    #    with in_features coords -> 2*out_features Fourier features.
    N, in_features, out_features = 8, 4, 32
    x = jax.random.normal(k_x, (N, in_features), dtype=jnp.float32)
    weight, bias = make_params(k_p, in_features, out_features, std_dev=3.0)

    out = jax.block_until_ready(fourier_embedding(x, weight, bias))
    ref = _reference(x, weight, bias)
    assert out.shape == (N, 2 * out_features)
    assert jnp.allclose(out, ref, atol=1e-5, rtol=1e-5)

    # 2) Multi-step row grid with a partial final row tile (masked writeback).
    N2 = 200
    x2 = jax.random.normal(k_x2, (N2, in_features), dtype=jnp.float32)
    out2 = jax.block_until_ready(fourier_embedding(x2, weight, bias, tile_n=64))
    ref2 = _reference(x2, weight, bias)
    assert out2.shape == (N2, 2 * out_features)
    assert jnp.allclose(out2, ref2, atol=1e-5, rtol=1e-5)

    # 3) Feature-tiled (split sin/cos outputs) path.
    N3, F3 = 64, 256
    x3 = jax.random.normal(k_x3, (N3, in_features), dtype=jnp.float32)
    w3, b3 = make_params(k_p3, in_features, F3, std_dev=3.0)
    out3 = jax.block_until_ready(fourier_embedding(x3, w3, b3, tile_f=128))
    ref3 = _reference(x3, w3, b3)
    assert out3.shape == (N3, 2 * F3)
    assert jnp.allclose(out3, ref3, atol=1e-5, rtol=1e-5)

    print("KERNEL_OK")
</pallas_src>

<mosaic_0001>
module attributes {stable_mosaic.version = 11 : i64} {
  func.func @_fourier_kernel_single(%arg0: i32, %arg1: i32, %arg2: memref<8x4xf32, #tpu.memory_space<vmem>>, %arg3: memref<4x32xf32, #tpu.memory_space<vmem>>, %arg4: memref<1x32xf32, #tpu.memory_space<vmem>>, %arg5: memref<8x64xf32, #tpu.memory_space<vmem>>) attributes {dimension_semantics = [#tpu.dimension_semantics<parallel>, #tpu.dimension_semantics<parallel>], iteration_bounds = array<i64: 1, 1>, scalar_prefetch = 0 : i64, scratch_operands = 0 : i64, tpu.core_type = #tpu.core_type<tc>, window_params = [{transform_indices = @transform_0, window_bounds = array<i64: 8, 4>}, {transform_indices = @transform_1, window_bounds = array<i64: 4, 32>}, {transform_indices = @transform_2, window_bounds = array<i64: 1, 32>}, {transform_indices = @transform_3, window_bounds = array<i64: 8, 64>}]} {
    %c0 = arith.constant 0 : index
    %c0_0 = arith.constant 0 : index
    %0 = vector.load %arg2[%c0, %c0_0] : memref<8x4xf32, #tpu.memory_space<vmem>>, vector<8x4xf32>
    %c0_1 = arith.constant 0 : index
    %c0_2 = arith.constant 0 : index
    %1 = vector.load %arg3[%c0_1, %c0_2] : memref<4x32xf32, #tpu.memory_space<vmem>>, vector<4x32xf32>
    %cst = arith.constant dense<0.000000e+00> : vector<8x32xf32>
    %2 = tpu.matmul %0, %1, %cst {dimension_numbers = #tpu.dot_dimension_numbers<[1], [0], [0], [1], [0, 0, 1, 1], [], []>} : vector<8x4xf32>, vector<4x32xf32>, vector<8x32xf32> -> vector<8x32xf32>
    %c0_3 = arith.constant 0 : index
    %c0_4 = arith.constant 0 : index
    %3 = vector.load %arg4[%c0_3, %c0_4] : memref<1x32xf32, #tpu.memory_space<vmem>>, vector<1x32xf32>
    %4 = vector.broadcast %3 : vector<1x32xf32> to vector<8x32xf32>
    %5 = arith.addf %2, %4 : vector<8x32xf32>
    %6 = math.sin %5 : vector<8x32xf32>
    %c0_5 = arith.constant 0 : index
    %c0_6 = arith.constant 0 : index
    %7 = vector.load %arg5[%c0_5, %c0_6] : memref<8x64xf32, #tpu.memory_space<vmem>>, vector<8x32xf32>
    tpu.vector_store %arg5[%c0_5, %c0_6], %6 {strides = array<i32>} : memref<8x64xf32, #tpu.memory_space<vmem>>, vector<8x32xf32>,
    %8 = math.cos %5 : vector<8x32xf32>
    %c0_7 = arith.constant 0 : index
    %c32 = arith.constant 32 : index
    %9 = vector.load %arg5[%c0_7, %c32] : memref<8x64xf32, #tpu.memory_space<vmem>>, vector<8x32xf32>
    tpu.vector_store %arg5[%c0_7, %c32], %8 {strides = array<i32>} : memref<8x64xf32, #tpu.memory_space<vmem>>, vector<8x32xf32>,
    return
  }
  func.func @transform_0(%arg0: i32, %arg1: i32) -> (i32, i32) {
    %c0_i32 = arith.constant 0 : i32
    %c0_i32_0 = arith.constant 0 : i32
    return %arg0, %c0_i32 : i32, i32
  }
  func.func @transform_1(%arg0: i32, %arg1: i32) -> (i32, i32) {
    %c0_i32 = arith.constant 0 : i32
    %c0_i32_0 = arith.constant 0 : i32
    return %c0_i32, %arg1 : i32, i32
  }
  func.func @transform_2(%arg0: i32, %arg1: i32) -> (i32, i32) {
    %c0_i32 = arith.constant 0 : i32
    %c0_i32_0 = arith.constant 0 : i32
    return %c0_i32, %arg1 : i32, i32
  }
  func.func @transform_3(%arg0: i32, %arg1: i32) -> (i32, i32) {
    %c0_i32 = arith.constant 0 : i32
    %c0_i32_0 = arith.constant 0 : i32
    return %arg0, %c0_i32 : i32, i32
  }
}

</mosaic_0001>

<llo_original>
// kernel: tpu_custom_call.1
$region0: #{tpu_custom_call.1}
  #allocation0 [shape = 'u32[]', space=smem, size = 0x4, offset = 0x4, fixed_abs, tag = 'smem constant byte address 0x4 - core index']
  #allocation1 [shape = 'u32[144,128]{1,0:T(1,128)}', space=vmem, size = 0x12000, scoped, tag = 'internal scratch']
  %s0 = inlined_call_operand.vmem [shape: f32[8,4], index: 0, kind: input, shape index: {}]
  %s1 = inlined_call_operand.vmem [shape: f32[4,32], index: 1, kind: input, shape index: {}]
  %s2 = inlined_call_operand.vmem [shape: f32[1,32], index: 2, kind: input, shape index: {}]
  %s3 = inlined_call_operand.hbm [shape: f32[8,64], index: 3, kind: output, shape index: {}]
  %s4 = sld [smem:[#allocation0]]
  $region22: #{tpu_custom_call.1} parent=0
    _
  %s6 = ssub.s32 1, %s4
  %s7 = scalar_select 0, %s6, %s4
  $region1: #{tpu_custom_call.1} parent=0
    #allocation2 [shape = 'u8[4096]{0}', space=vmem, size = 0x1000, scoped, tag = 'output window, operand 0, single buffered']
    #allocation3 [shape = 's32[1]{0}', space=sflag, size = 0x4, scoped, tag = 'scoped memory for tpu_custom_call.1']
    %8 = vsyncpa [#allocation3], 0
    // Predicated region
    $region2: #{tpu_custom_call.1} parent=1 // pred_check
      _
    $region3: #{tpu_custom_call.1} parent=1 // pred_check_branch
      %10 = sbr.rel (0) target = $region5
    $region4: #{tpu_custom_call.1} parent=1 // pred_region
      _
    $region5: #{tpu_custom_call.1} parent=1 // pred_fallthru
      _
    // Predicated region
    $region6: #{tpu_custom_call.1} parent=1 // pred_check
      _
    $region7: #{tpu_custom_call.1} parent=1 // pred_check_branch
      %12 = sbr.rel (0) target = $region9
    $region8: #{tpu_custom_call.1} parent=1 // pred_region
      _
    $region9: #{tpu_custom_call.1} parent=1 // pred_fallthru
      _
    // Predicated region
    $region10: #{tpu_custom_call.1} parent=1 // pred_check
      _
    $region11: #{tpu_custom_call.1} parent=1 // pred_check_branch
      %14 = sbr.rel (0) target = $region13
    $region12: #{tpu_custom_call.1} parent=1 // pred_region
      _
    $region13: #{tpu_custom_call.1} parent=1 // pred_fallthru
      _
    %v15 = vld [vmem:[%s0] sm:$0xff]
    %v16 = vld [vmem:[%s1] sm:$0xf]
    %v17 = vld [vmem:[%s2] sm:$0x1]
    %v19 = vlaneseq
    %v20 = vshrl.u32 %v19, 7
    %v21 = vsub.s32 0, %v20
    %v22 = vrot.slane %v17, %v21
    %vm24 = vcmask 31744
    %v26 = vsel %vm24, %v15, 0
    %vm28 = vcmask 1043456
    %v30 = vsel %vm28, %v16, 0
    %32 = vmatprep.subr.mxu0 0.0
    %33 = vmatpush1.msra.mxu0 %v30
    %34 = vmatprep.subr.mxu0 0.0
    %35 = vmatpush1.msra.mxu0 0.0
    %36 = vmatprep.subr.mxu0 0.0
    %37 = vmatpush1.msra.mxu0 0.0
    %38 = vmatprep.subr.mxu0 0.0
    %39 = vmatpush1.msra.mxu0 0.0
    %40 = vmatprep.subr.mxu0 0.0
    %41 = vmatpush1.msra.mxu0 0.0
    %42 = vmatprep.subr.mxu0 0.0
    %43 = vmatpush1.msra.mxu0 0.0
    %44 = vmatprep.subr.mxu0 0.0
    %45 = vmatpush1.msra.mxu0 0.0
    %46 = vmatprep.subr.mxu0 0.0
    %47 = vmatpush1.msra.mxu0 0.0
    %48 = vmatprep.subr.mxu0 0.0
    %49 = vmatpush1.msra.mxu0 0.0
    %50 = vmatprep.subr.mxu0 0.0
    %51 = vmatpush1.msra.mxu0 0.0
    %52 = vmatprep.subr.mxu0 0.0
    %53 = vmatpush1.msra.mxu0 0.0
    %54 = vmatprep.subr.mxu0 0.0
    %55 = vmatpush1.msra.mxu0 0.0
    %56 = vmatprep.subr.mxu0 0.0
    %57 = vmatpush1.msra.mxu0 0.0
    %58 = vmatprep.subr.mxu0 0.0
    %59 = vmatpush1.msra.mxu0 0.0
    %60 = vmatprep.subr.mxu0 0.0
    %61 = vmatpush1.msra.mxu0 0.0
    %62 = vmatprep.subr.mxu0 0.0
    %63 = vmatpush1.msra.mxu0 0.0
    %64 = vmatprep.subr.mxu0 0.0
    %65 = vmatpush1.msra.mxu0 0.0
    %66 = vmatprep.subr.mxu0 0.0
    %67 = vmatpush1.msra.mxu0 0.0
    %68 = vmatprep.subr.mxu0 0.0
    %69 = vmatpush1.msra.mxu0 0.0
    %70 = vmatprep.subr.mxu0 0.0
    %71 = vmatpush1.msra.mxu0 0.0
    %72 = vmatprep.subr.mxu0 0.0
    %73 = vmatpush1.msra.mxu0 0.0
    %74 = vmatprep.subr.mxu0 0.0
    %75 = vmatpush1.msra.mxu0 0.0
    %76 = vmatprep.subr.mxu0 0.0
    %77 = vmatpush1.msra.mxu0 0.0
    %78 = vmatprep.subr.mxu0 0.0
    %79 = vmatpush1.msra.mxu0 0.0
    %80 = vmatprep.subr.mxu0 0.0
    %81 = vmatpush1.msra.mxu0 0.0
    %82 = vmatprep.subr.mxu0 0.0
    %83 = vmatpush1.msra.mxu0 0.0
    %84 = vmatprep.subr.mxu0 0.0
    %85 = vmatpush1.msra.mxu0 0.0
    %86 = vmatprep.subr.mxu0 0.0
    %87 = vmatpush1.msra.mxu0 0.0
    %88 = vmatprep.subr.mxu0 0.0
    %89 = vmatpush1.msra.mxu0 0.0
    %90 = vmatprep.subr.mxu0 0.0
    %91 = vmatpush1.msra.mxu0 0.0
    %92 = vmatprep.subr.mxu0 0.0
    %93 = vmatpush1.msra.mxu0 0.0
    %94 = vmatprep.subr.mxu0 0.0
    %95 = vmatpush1.msra.mxu0 0.0
    %96 = vmatprep.mubr.f32.mxu0 0.0
    %97 = vmatmul.mubr.f32.gmra.mrb[0].mxu0 %v26
    %v98 = vpop.f32.mrb[0].mxu0
    %v99 = vadd.f32 %v22, %v98
    %v100 = vpop.f32.mrb[0].mxu0
    %101 = vdwg.mxu0
    %v102 = vand.u32 2147483647, %v99
    %vm103 = vcmp.le.f32.partialorder %v102, 0.7853982
    %vm104 = vcmp.lt.s32.totalorder %v99, 0
    %v105 = vand.u32 %v99, 2139095040
    %v106 = vshrl.u32 %v105, 23
    %v107 = vsub.s32 %v106, 127
    %v108 = vand.u32 2147483647, %v99
    %v109 = vand.u32 %v108, 8388607
    %v110 = vor.u32 %v109, 8388608
    %v111 = vsub.s32 0, %v110
    %v112 = vadd.s32 %v107, 1
    %vm113 = vcmp.gt.s32.totalorder %v112, 0
    %v114 = vsel %vm113, %v112, 0
    %v115 = vshrl.u32 %v114, 5
    %v116 = vand.u32 %v114, 31
    %v117 = vsub.s32 32, %v116
    %v118 = vshrl.u32 683565275, %v117
    %v119 = vshll.u32 683565275, %v116
    %v120 = vshrl.u32 2475754826, %v117
    %v121 = vor.u32 %v119, %v120
    %v122 = vshll.u32 2475754826, %v116
    %v123 = vshrl.u32 2131351028, %v117
    %v124 = vor.u32 %v122, %v123
    %v125 = vshll.u32 2131351028, %v116
    %v126 = vshrl.u32 2102212464, %v117
    %v127 = vor.u32 %v125, %v126
    %v128 = vshll.u32 2102212464, %v116
    %v129 = vshrl.u32 920167782, %v117
    %v130 = vor.u32 %v128, %v129
    %v131 = vshll.u32 920167782, %v116
    %v132 = vshrl.u32 1326507024, %v117
    %v133 = vor.u32 %v131, %v132
    %vm134 = vcmp.lt.s32.totalorder %v115, 1
    %vm135 = vcmp.lt.s32.totalorder %v115, 2
    %vm136 = vcmp.lt.s32.totalorder %v115, 3
    %vm137 = vcmp.lt.s32.totalorder %v115, 4
    %v138 = vsel %vm134, %v118, %v121
    %v139 = vsel %vm137, %v127, 2102212464
    %v140 = vsel %vm136, %v124, %v139
    %v141 = vsel %vm135, %v138, %v140
    %v142 = vsel %vm134, %v121, %v124
    %v143 = vsel %vm137, %v130, 920167782
    %v144 = vsel %vm136, %v127, %v143
    %v145 = vsel %vm135, %v142, %v144
    %v146 = vsel %vm134, %v124, %v127
    %v147 = vsel %vm137, %v133, 1326507024
    %v148 = vsel %vm136, %v130, %v147
    %v149 = vsel %vm135, %v146, %v148
    %v150 = vshll.u32 %v110, 8
    %v151 = vmul.u32.u64.compose %v150, %v149
    %v152 = vextract.low.u32 %v151
    %v153 = vextract.high.u32 %v151
    %v154 = vmul.u32.u64.compose %v150, %v145
    %v155 = vextract.low.u32 %v154
    %v156 = vextract.high.u32 %v154
    %v157 = vmul.u32 %v150, %v141
    %v158 = vadd.s32 %v153, %v155
    %vm159 = vc.u32 %v153, %v155
    %v160 = vadd.s32 %v156, 1
    %v161 = vsel %vm159, %v160, %v156
    %v162 = vadd.s32 %v157, %v161
    %v163 = vadd.s32 %v162, 536870912
    %v164 = vshrl.u32 %v163, 30
    %v165 = vshll.u32 %v164, 30
    %v166 = vsub.s32 %v162, %v165
    %vm167 = vcmp.lt.s32.totalorder %v166, 0
    %v168 = vsub.s32 0, %v166
    %v169 = vsel %vm167, %v168, %v166
    %v170 = vclz %v169
    %v171 = vsub.s32 %v170, 2
    %vm172 = vcmp.gt.s32.totalorder 0, %v171
    %v173 = vsel %vm172, 0, %v171
    %v174 = vsub.s32 32, %v173
    %v175 = vshll.u32 %v166, %v173
    %v176 = vshrl.u32 %v158, %v174
    %v177 = vor.u32 %v175, %v176
    %v178 = vsub.s32 4294967266, %v173
    %v179 = vadd.s32 %v178, 127
    %v180 = vshll.u32 %v179, 23
    %v181 = vor.u32 4788187, %v180
    %v182 = vand.u32 2147483647, %v181
    %v184 = vcvt.s32.f32 %v177
    %v185 = vmul.f32 %v184, %v182
    %v186 = vxor.u32 %v185, 2147483648
    %v187 = vsel %vm104, %v186, %v185
    %v188 = vsub.s32 4, %v164
    %v189 = vsel %vm104, %v188, %v164
    %v190 = vsel %vm103, %v99, %v187
    %v191 = vsel %vm103, 0, %v189
    %v192 = vcosq.f32.pop %v190
    %v193 = vsinq.f32.pop %v190
    %vm194 = vweird.f32 %v99
    %v195 = vadd.s32 %v191, 3
    %v196 = vand.u32 %v195, 3
    %vm197 = vcmp.lt.s32.totalorder %v196, 2
    %vm198 = vcmp.eq.s32.totalorder %v196, 0
    %v199 = vxor.u32 %v193, 2147483648
    %v200 = vsel %vm198, %v192, %v199
    %vm201 = vcmp.eq.s32.totalorder %v196, 2
    %v202 = vxor.u32 %v192, 2147483648
    %v203 = vsel %vm201, %v202, %v193
    %v204 = vsel %vm197, %v200, %v203
    %v205 = vsel %vm194, nan, %v204
    %vm206 = vcmask 261120
    %207 = vst.msk [vmem:[#allocation2] sm:$0xff] %vm206, %v205
    %v208 = vand.u32 2147483647, %v99
    %vm209 = vcmp.le.f32.partialorder %v208, 0.7853982
    %vm210 = vcmp.lt.s32.totalorder %v99, 0
    %v211 = vand.u32 %v99, 2139095040
    %v212 = vshrl.u32 %v211, 23
    %v213 = vsub.s32 %v212, 127
    %v214 = vand.u32 2147483647, %v99
    %v215 = vand.u32 %v214, 8388607
    %v216 = vor.u32 %v215, 8388608
    %v217 = vsub.s32 0, %v216
    %v218 = vadd.s32 %v213, 1
    %vm219 = vcmp.gt.s32.totalorder %v218, 0
    %v220 = vsel %vm219, %v218, 0
    %v221 = vshrl.u32 %v220, 5
    %v222 = vand.u32 %v220, 31
    %v223 = vsub.s32 32, %v222
    %v224 = vshrl.u32 683565275, %v223
    %v225 = vshll.u32 683565275, %v222
    %v226 = vshrl.u32 2475754826, %v223
    %v227 = vor.u32 %v225, %v226
    %v228 = vshll.u32 2475754826, %v222
    %v229 = vshrl.u32 2131351028, %v223
    %v230 = vor.u32 %v228, %v229
    %v231 = vshll.u32 2131351028, %v222
    %v232 = vshrl.u32 2102212464, %v223
    %v233 = vor.u32 %v231, %v232
    %v234 = vshll.u32 2102212464, %v222
    %v235 = vshrl.u32 920167782, %v223
    %v236 = vor.u32 %v234, %v235
    %v237 = vshll.u32 920167782, %v222
    %v238 = vshrl.u32 1326507024, %v223
    %v239 = vor.u32 %v237, %v238
    %vm240 = vcmp.lt.s32.totalorder %v221, 1
    %vm241 = vcmp.lt.s32.totalorder %v221, 2
    %vm242 = vcmp.lt.s32.totalorder %v221, 3
    %vm243 = vcmp.lt.s32.totalorder %v221, 4
    %v244 = vsel %vm240, %v224, %v227
    %v245 = vsel %vm243, %v233, 2102212464
    %v246 = vsel %vm242, %v230, %v245
    %v247 = vsel %vm241, %v244, %v246
    %v248 = vsel %vm240, %v227, %v230
    %v249 = vsel %vm243, %v236, 920167782
    %v250 = vsel %vm242, %v233, %v249
    %v251 = vsel %vm241, %v248, %v250
    %v252 = vsel %vm240, %v230, %v233
    %v253 = vsel %vm243, %v239, 1326507024
    %v254 = vsel %vm242, %v236, %v253
    %v255 = vsel %vm241, %v252, %v254
    %v256 = vshll.u32 %v216, 8
    %v257 = vmul.u32.u64.compose %v256, %v255
    %v258 = vextract.low.u32 %v257
    %v259 = vextract.high.u32 %v257
    %v260 = vmul.u32.u64.compose %v256, %v251
    %v261 = vextract.low.u32 %v260
    %v262 = vextract.high.u32 %v260
    %v263 = vmul.u32 %v256, %v247
    %v264 = vadd.s32 %v259, %v261
    %vm265 = vc.u32 %v259, %v261
    %v266 = vadd.s32 %v262, 1
    %v267 = vsel %vm265, %v266, %v262
    %v268 = vadd.s32 %v263, %v267
    %v269 = vadd.s32 %v268, 536870912
    %v270 = vshrl.u32 %v269, 30
    %v271 = vshll.u32 %v270, 30
    %v272 = vsub.s32 %v268, %v271
    %vm273 = vcmp.lt.s32.totalorder %v272, 0
    %v274 = vsub.s32 0, %v272
    %v275 = vsel %vm273, %v274, %v272
    %v276 = vclz %v275
    %v277 = vsub.s32 %v276, 2
    %vm278 = vcmp.gt.s32.totalorder 0, %v277
    %v279 = vsel %vm278, 0, %v277
    %v280 = vsub.s32 32, %v279
    %v281 = vshll.u32 %v272, %v279
    %v282 = vshrl.u32 %v264, %v280
    %v283 = vor.u32 %v281, %v282
    %v284 = vsub.s32 4294967266, %v279
    %v285 = vadd.s32 %v284, 127
    %v286 = vshll.u32 %v285, 23
    %v287 = vor.u32 4788187, %v286
    %v288 = vand.u32 2147483647, %v287
    %v290 = vcvt.s32.f32 %v283
    %v291 = vmul.f32 %v290, %v288
    %v292 = vxor.u32 %v291, 2147483648
    %v293 = vsel %vm210, %v292, %v291
    %v294 = vsub.s32 4, %v270
    %v295 = vsel %vm210, %v294, %v270
    %v296 = vsel %vm209, %v99, %v293
    %v297 = vsel %vm209, 0, %v295
    %v298 = vcosq.f32.pop %v296
    %v299 = vsinq.f32.pop %v296
    %vm300 = vweird.f32 %v99
    %v301 = vand.u32 %v297, 3
    %vm302 = vcmp.lt.s32.totalorder %v301, 2
    %vm303 = vcmp.eq.s32.totalorder %v301, 0
    %v304 = vxor.u32 %v299, 2147483648
    %v305 = vsel %vm303, %v298, %v304
    %vm306 = vcmp.eq.s32.totalorder %v301, 2
    %v307 = vxor.u32 %v298, 2147483648
    %v308 = vsel %vm306, %v307, %v299
    %v309 = vsel %vm302, %v305, %v308
    %v310 = vsel %vm300, nan, %v309
    %312 = vrot.lane.b32.xlu0 %v310, 32
    %v313 = vpop.permute.xlu0 %312
    %vm315 = vcmask 523520
    %316 = vst.msk [vmem:[#allocation2] sm:$0xff] %vm315, %v313
    // Predicated region
    $region14: #{tpu_custom_call.1} parent=1 // pred_check
      _
    $region15: #{tpu_custom_call.1} parent=1 // pred_check_branch
      %318 = sbr.rel (0) target = $region17
    $region16: #{tpu_custom_call.1} parent=1 // pred_region
      %s320 = ssub.s32 128, 128
      %321 = vsyncadd [#allocation3], %s320
      %s323 = sshll.u32 [#allocation2], 4
      %s324 = int_to_ptr.vmem [resolvable:$true] %s323
      %326 = dma.vmem_to_hbm [thread:$0]  %s324, 128, %s3, [#allocation3]
    $region17: #{tpu_custom_call.1} parent=1 // pred_fallthru
      _
    // Predicated region
    $region18: #{tpu_custom_call.1} parent=1 // pred_check
      _
    $region19: #{tpu_custom_call.1} parent=1 // pred_check_branch
      %328 = sbr.rel (0) target = $region21
    $region20: #{tpu_custom_call.1} parent=1 // pred_region
      %329 = dma.done [#allocation3], 128
    $region21: #{tpu_custom_call.1} parent=1 // pred_fallthru
      _
    %330 = vsyncpa [#allocation3], 1

</llo_original>
